<compile_context>
chip_gen: v6e
topology: v6e:2x2x1
jax: 0.10.0
libtpu: 0.0.40
codegen_flags: <defaults>
</compile_context>

<pallas_src>
import math

import jax
import jax.numpy as jnp
from jax.experimental import pallas as pl
from jax.experimental.pallas import tpu as pltpu

_MAX_FUSED_BATCHES = 64  # cap on static unroll over fused batches per block


def _block_bytes_target():
    """Per-block byte target, scaled to the chip generation when known:
    ~8 MiB on 128 MiB-VMEM chips (v5e/v6e), ~4 MiB on 64 MiB-VMEM (v7x)."""
    vmem = None
    try:
        info = pltpu.get_tpu_info()
        vmem = getattr(info, "vmem_capacity_bytes", None)
    except Exception:
        vmem = None
    if not vmem:
        return 4 * 1024 * 1024  # safe everywhere
    return int(max(2 * 1024 * 1024, min(8 * 1024 * 1024, vmem // 16)))


def _shakedrop_scale_kernel(mask_ref, x_ref, o_ref):
    # mask_ref: (B,) float32 scalars in SMEM (scalar prefetch).
    # x_ref/o_ref: (Bb, T, L) VMEM block covering batches [g*Bb, (g+1)*Bb).
    g = pl.program_id(0)
    bb = x_ref.shape[0]
    for i in range(bb):  # static unroll; bb is capped at _MAX_FUSED_BATCHES
        m = mask_ref[g * bb + i].astype(x_ref.dtype)
        o_ref[i, ...] = (x_ref[i, ...] * m).astype(o_ref.dtype)


def _choose_layout(n):
    """n is a multiple of 128. Pick lane width L (multiple of 128 dividing n),
    preferring large L while keeping >= 8 rows so sublanes stay occupied.
    Returns (L, R) with R = n // L."""
    best = 128
    lane = 256
    while lane <= min(n, 4096):
        if n % lane == 0 and (n // lane) >= 8:
            best = lane
        lane += 128
    return best, n // best


def _row_block(r, lane, itemsize, budget):
    """Rows per block when a single batch slab exceeds the budget: prefer the
    largest multiple of the sublane packing factor that DIVIDES r (no ragged
    tail block), otherwise the largest multiple that fits the byte budget."""
    sub = max(8, 32 // max(itemsize, 1))  # 8 for f32, 16 for bf16, 32 for int8
    t_max = max(1, budget // (lane * itemsize))
    if r <= t_max:
        return r  # full row extent is always a legal block dim
    t_cap = max(sub, (t_max // sub) * sub)
    t = t_cap
    while t >= sub:
        if r % t == 0:
            return t
        t -= sub
    return t_cap  # ragged tail fallback (still correct; Pallas masks the tail)


def _largest_divisor_leq(n, cap):
    cap = max(1, min(n, cap))
    for d in range(cap, 0, -1):
        if n % d == 0:
            return d
    return 1


def _scale_per_batch(x2d, mask_f32):
    """out[b, :] = x2d[b, :] * mask_f32[b], as a lane-dense Pallas kernel."""
    B, N = x2d.shape
    itemsize = x2d.dtype.itemsize

    # Pad the feature dim to a multiple of 128 so stores are unmasked and
    # lane-dense; the (tiny) pad is sliced off after the kernel.
    n_pad = ((N + 127) // 128) * 128
    if n_pad != N:
        x2d = jnp.pad(x2d, ((0, 0), (0, n_pad - N)))

    L, R = _choose_layout(n_pad)
    block_bytes = _block_bytes_target()
    slab = R * L * itemsize  # bytes per batch element

    if slab <= block_bytes:
        # Fuse several batches per block so each grid step moves ~block_bytes;
        # otherwise the fixed ~0.35us per-step overhead dominates small slabs.
        bb = _largest_divisor_leq(B, min(block_bytes // slab, _MAX_FUSED_BATCHES))
        T = R
    else:
        bb = 1
        T = _row_block(R, L, itemsize, block_bytes)

    # in + out, double-buffered by the pipeline, plus ~50% slack.
    block_live = 4 * bb * T * L * itemsize
    vmem_limit = int(min(48 * 1024 * 1024,
                         max(16 * 1024 * 1024, 3 * block_live // 2)))

    x3d = x2d.reshape(B, R, L)
    out3d = pl.pallas_call(
        _shakedrop_scale_kernel,
        out_shape=jax.ShapeDtypeStruct((B, R, L), x2d.dtype),
        grid_spec=pltpu.PrefetchScalarGridSpec(
            num_scalar_prefetch=1,
            grid=(B // bb, pl.cdiv(R, T)),
            in_specs=[pl.BlockSpec((bb, T, L), lambda g, j, m: (g, j, 0))],
            out_specs=pl.BlockSpec((bb, T, L), lambda g, j, m: (g, j, 0)),
        ),
        compiler_params=pltpu.CompilerParams(
            dimension_semantics=("parallel", "parallel"),
            vmem_limit_bytes=vmem_limit),
    )(mask_f32, x3d)

    out2d = out3d.reshape(B, n_pad)
    if n_pad != N:
        out2d = out2d[:, :N]
    return out2d


def shakedrop_forward(x, key, *, p_drop=0.5, alpha_range=(-1.0, 1.0),
                      training=True):
    """ShakeDrop forward. x: (B, C, H, W) (or any (B, ...)) float array."""
    if not training:
        # Eval mode is a constant scalar multiply: let XLA fuse it for free
        # instead of paying an extra HBM round-trip through a kernel.
        return x * jnp.asarray(1.0 - p_drop, dtype=x.dtype)

    B = x.shape[0]
    N = math.prod(x.shape[1:])

    kg, ka, kb = jax.random.split(key, 3)
    # gate/alpha/mask are computed in float32; the kernel casts the scalar to
    # x's dtype so bf16 tiles stay packed.
    gate = jax.random.bernoulli(kg, 1.0 - p_drop, (B,)).astype(jnp.float32)
    alpha = jax.random.uniform(ka, (B,), dtype=jnp.float32,
                               minval=alpha_range[0], maxval=alpha_range[1])
    mask = gate + (1.0 - gate) * alpha
    # beta is only consumed by the PyTorch custom backward; the forward simply
    # passes `output` through, so beta is generated but unused here.
    _beta = jax.random.uniform(kb, (B,), dtype=jnp.float32)
    # TODO(synk): custom VJP (grad * (mask + (1 - mask) * beta)) not implemented
    # since only the forward pass is required; mask/beta would be residuals.
    # TODO(synk): the downstream residual add (skip + out) could be fused in as
    # a second VMEM input to save one full HBM pass of the activation.

    x2d = x.reshape(B, N)
    out2d = _scale_per_batch(x2d, mask)
    return out2d.reshape(x.shape)


if __name__ == "__main__":
    key = jax.random.PRNGKey(0)
    k_x, k_sd = jax.random.split(key)

    B, C, H, W = 2, 4, 16, 16
    x = jax.random.normal(k_x, (B, C, H, W), dtype=jnp.float32)

    # Training-mode forward (the interesting path: dense tiled Pallas kernel).
    out_train = jax.block_until_ready(
        shakedrop_forward(x, k_sd, p_drop=0.5, alpha_range=(-1.0, 1.0),
                          training=True))

    # Eval-mode forward: x * (1 - p_drop), no kernel.
    out_eval = jax.block_until_ready(
        shakedrop_forward(x, k_sd, p_drop=0.5, training=False))

    # Pure-JAX reference (re-derives the same per-batch mask).
    kg, ka, _ = jax.random.split(k_sd, 3)
    gate = jax.random.bernoulli(kg, 0.5, (B,)).astype(jnp.float32)
    alpha = jax.random.uniform(ka, (B,), dtype=jnp.float32,
                               minval=-1.0, maxval=1.0)
    mask_ref = (gate + (1.0 - gate) * alpha).reshape(B, 1, 1, 1)
    ref_train = x * mask_ref
    ref_eval = x * 0.5

    assert out_train.shape == x.shape and out_train.dtype == x.dtype
    assert jnp.allclose(out_train, ref_train, atol=1e-6, rtol=1e-6)
    assert jnp.allclose(out_eval, ref_eval, atol=1e-6, rtol=1e-6)

    # Feature size not divisible by 128 (3*7*7 = 147) exercises the pad path.
    x_odd = jax.random.normal(k_x, (B, 3, 7, 7), dtype=jnp.float32)
    out_odd = jax.block_until_ready(
        shakedrop_forward(x_odd, k_sd, p_drop=0.5, training=True))
    ref_odd = x_odd * mask_ref
    assert jnp.allclose(out_odd, ref_odd, atol=1e-6, rtol=1e-6)

    print("KERNEL_OK")
</pallas_src>

<mosaic_0001>
module attributes {stable_mosaic.version = 11 : i64} {
  func.func @_shakedrop_scale_kernel(%arg0: i32, %arg1: i32, %arg2: memref<2xf32, #tpu.memory_space<smem>>, %arg3: memref<2x8x128xf32, #tpu.memory_space<vmem>>, %arg4: memref<2x8x128xf32, #tpu.memory_space<vmem>>) attributes {dimension_semantics = [#tpu.dimension_semantics<parallel>, #tpu.dimension_semantics<parallel>], iteration_bounds = array<i64: 1, 1>, scalar_prefetch = 1 : i64, scratch_operands = 0 : i64, tpu.core_type = #tpu.core_type<tc>, window_params = [{transform_indices = @transform_0, window_bounds = array<i64: 2, 8, 128>}, {transform_indices = @transform_1, window_bounds = array<i64: 2, 8, 128>}]} {
    %c2_i32 = arith.constant 2 : i32
    %0 = arith.muli %arg0, %c2_i32 : i32
    %c0_i32 = arith.constant 0 : i32
    %1 = arith.addi %0, %c0_i32 : i32
    %2 = arith.index_cast %1 : i32 to index
    %3 = memref.load %arg2[%2] : memref<2xf32, #tpu.memory_space<smem>>
    %c0 = arith.constant 0 : index
    %c0_0 = arith.constant 0 : index
    %c0_1 = arith.constant 0 : index
    %4 = vector.load %arg3[%c0, %c0_0, %c0_1] : memref<2x8x128xf32, #tpu.memory_space<vmem>>, vector<1x8x128xf32>
    %5 = vector.shape_cast %4 : vector<1x8x128xf32> to vector<8x128xf32>
    %6 = vector.broadcast %3 : f32 to vector<8x128xf32>
    %7 = arith.mulf %5, %6 : vector<8x128xf32>
    %c0_2 = arith.constant 0 : index
    %c0_3 = arith.constant 0 : index
    %c0_4 = arith.constant 0 : index
    %8 = vector.load %arg4[%c0_2, %c0_3, %c0_4] : memref<2x8x128xf32, #tpu.memory_space<vmem>>, vector<1x8x128xf32>
    %9 = vector.shape_cast %8 : vector<1x8x128xf32> to vector<8x128xf32>
    %10 = vector.shape_cast %7 : vector<8x128xf32> to vector<1x8x128xf32>
    tpu.vector_store %arg4[%c0_2, %c0_3, %c0_4], %10 {strides = array<i32>} : memref<2x8x128xf32, #tpu.memory_space<vmem>>, vector<1x8x128xf32>,
    %c2_i32_5 = arith.constant 2 : i32
    %11 = arith.muli %arg0, %c2_i32_5 : i32
    %c1_i32 = arith.constant 1 : i32
    %12 = arith.addi %11, %c1_i32 : i32
    %13 = arith.index_cast %12 : i32 to index
    %14 = memref.load %arg2[%13] : memref<2xf32, #tpu.memory_space<smem>>
    %c1 = arith.constant 1 : index
    %c0_6 = arith.constant 0 : index
    %c0_7 = arith.constant 0 : index
    %15 = vector.load %arg3[%c1, %c0_6, %c0_7] : memref<2x8x128xf32, #tpu.memory_space<vmem>>, vector<1x8x128xf32>
    %16 = vector.shape_cast %15 : vector<1x8x128xf32> to vector<8x128xf32>
    %17 = vector.broadcast %14 : f32 to vector<8x128xf32>
    %18 = arith.mulf %16, %17 : vector<8x128xf32>
    %c1_8 = arith.constant 1 : index
    %c0_9 = arith.constant 0 : index
    %c0_10 = arith.constant 0 : index
    %19 = vector.load %arg4[%c1_8, %c0_9, %c0_10] : memref<2x8x128xf32, #tpu.memory_space<vmem>>, vector<1x8x128xf32>
    %20 = vector.shape_cast %19 : vector<1x8x128xf32> to vector<8x128xf32>
    %21 = vector.shape_cast %18 : vector<8x128xf32> to vector<1x8x128xf32>
    tpu.vector_store %arg4[%c1_8, %c0_9, %c0_10], %21 {strides = array<i32>} : memref<2x8x128xf32, #tpu.memory_space<vmem>>, vector<1x8x128xf32>,
    return
  }
  func.func @transform_0(%arg0: i32, %arg1: i32, %arg2: memref<2xf32, #tpu.memory_space<smem>>) -> (i32, i32, i32) {
    %c0_i32 = arith.constant 0 : i32
    %c0_i32_0 = arith.constant 0 : i32
    return %arg0, %arg1, %c0_i32 : i32, i32, i32
  }
  func.func @transform_1(%arg0: i32, %arg1: i32, %arg2: memref<2xf32, #tpu.memory_space<smem>>) -> (i32, i32, i32) {
    %c0_i32 = arith.constant 0 : i32
    %c0_i32_0 = arith.constant 0 : i32
    return %arg0, %arg1, %c0_i32 : i32, i32, i32
  }
}

</mosaic_0001>

<llo_original>
// kernel: tpu_custom_call.1
$region0: #{tpu_custom_call.1}
  #allocation0 [shape = 'u32[]', space=smem, size = 0x4, offset = 0x4, fixed_abs, tag = 'smem constant byte address 0x4 - core index']
  #allocation1 [shape = 'u32[144,128]{1,0:T(1,128)}', space=vmem, size = 0x12000, scoped, tag = 'internal scratch']
  #allocation2 [shape = 's32[1]{0}', space=sflag, size = 0x4, scoped, tag = 'scoped memory for tpu_custom_call.1']
  #allocation3 [shape = 'u8[512]{0}', space=smem, size = 0x200, scoped, tag = 'prefetched SMEM operand 0']
  %s0 = inlined_call_operand.hbm [shape: f32[2], index: 0, kind: input, shape index: {}]
  %s1 = inlined_call_operand.hbm [shape: f32[2,8,128], index: 1, kind: input, shape index: {}]
  %s2 = inlined_call_operand.hbm [shape: f32[2,8,128], index: 2, kind: output, shape index: {}]
  %s3 = sld [smem:[#allocation0]]
  $region18: #{tpu_custom_call.1} parent=0
    _
  %s5 = ssub.s32 1, %s3
  %s6 = scalar_select 0, %s5, %s3
  %8 = dma.hbm_to_smem %s0, 16, [#allocation3], [#allocation2]
  %9 = dma.done [#allocation2], 16
  %10 = sfence
  $region1: #{tpu_custom_call.1} parent=0
    #allocation4 [shape = 'u8[8192]{0}', space=vmem, size = 0x2000, scoped, tag = 'input window, operand 1, single buffered']
    #allocation5 [shape = 's32[1]{0}', space=sflag, size = 0x4, scoped, tag = 'scoped memory for tpu_custom_call.1']
    #allocation6 [shape = 's32[1]{0}', space=sflag, size = 0x4, scoped, tag = 'scoped memory for tpu_custom_call.1']
    #allocation7 [shape = 'u8[8192]{0}', space=vmem, size = 0x2000, scoped, tag = 'output window, operand 0, single buffered']
    %11 = vsyncpa [#allocation5], 0
    %12 = vsyncpa [#allocation6], 0
    // Predicated region
    $region2: #{tpu_custom_call.1} parent=1 // pred_check
      _
    $region3: #{tpu_custom_call.1} parent=1 // pred_check_branch
      %14 = sbr.rel (0) target = $region5
    $region4: #{tpu_custom_call.1} parent=1 // pred_region
      %s16 = ssub.s32 256, 256
      %17 = vsyncadd [#allocation5], %s16
      %s18 = sshll.u32 [#allocation4], 4
      %s19 = int_to_ptr.vmem [resolvable:$true] %s18
      %24 = dma.hbm_to_vmem [thread:$0]  %s1, 256, %s19, [#allocation5], 128, 128, 8
    $region5: #{tpu_custom_call.1} parent=1 // pred_fallthru
      _
    // Predicated region
    $region6: #{tpu_custom_call.1} parent=1 // pred_check
      _
    $region7: #{tpu_custom_call.1} parent=1 // pred_check_branch
      %26 = sbr.rel (0) target = $region9
    $region8: #{tpu_custom_call.1} parent=1 // pred_region
      %27 = dma.done [#allocation5], 256
    $region9: #{tpu_custom_call.1} parent=1 // pred_fallthru
      _
    %s28 = smul.u32 0, 2
    %s29 = sld [smem:[#allocation3 + %s28]]
    %v30 = vld [vmem:[#allocation4] sm:$0xff]
    %v31 = vstv %s29
    %v32 = vmul.f32 %v30, %v31
    %33 = vst [vmem:[#allocation7] sm:$0xff] %v32
    %s34 = sadd.s32 %s28, 1
    %s35 = sld [smem:[#allocation3 + %s34]]
    %s36 = scalar_lea.vmem [#allocation4], 8
    %v37 = vld [vmem:[%s36] sm:$0xff]
    %v38 = vstv %s35
    %v39 = vmul.f32 %v37, %v38
    %s40 = scalar_lea.vmem [#allocation7], 8
    %41 = vst [vmem:[%s40] sm:$0xff] %v39
    // Predicated region
    $region10: #{tpu_custom_call.1} parent=1 // pred_check
      _
    $region11: #{tpu_custom_call.1} parent=1 // pred_check_branch
      %43 = sbr.rel (0) target = $region13
    $region12: #{tpu_custom_call.1} parent=1 // pred_region
      %s45 = ssub.s32 256, 256
      %46 = vsyncadd [#allocation6], %s45
      %s47 = sshll.u32 [#allocation7], 4
      %s48 = int_to_ptr.vmem [resolvable:$true] %s47
      %53 = dma.vmem_to_hbm [thread:$0]  %s48, 256, %s2, [#allocation6], 128, 128, 8
    $region13: #{tpu_custom_call.1} parent=1 // pred_fallthru
      _
    // Predicated region
    $region14: #{tpu_custom_call.1} parent=1 // pred_check
      _
    $region15: #{tpu_custom_call.1} parent=1 // pred_check_branch
      %55 = sbr.rel (0) target = $region17
    $region16: #{tpu_custom_call.1} parent=1 // pred_region
      %56 = dma.done [#allocation6], 256
    $region17: #{tpu_custom_call.1} parent=1 // pred_fallthru
      _
    %57 = vsyncpa [#allocation5], 1
    %58 = vsyncpa [#allocation6], 1

</llo_original>
